<compile_context>
chip_gen: v7x
topology: tpu7x:2x2x1
jax: 0.10.0
libtpu: 0.0.40
codegen_flags: <defaults>
</compile_context>

<pallas_src>
import math
import functools

import jax
import jax.numpy as jnp
from jax.experimental import pallas as pl
from jax.experimental.pallas import tpu as pltpu


def _round_up(x, m):
    return ((x + m - 1) // m) * m


def _split_hi_lo(x_f32):
    """fp32 -> (bf16 hi, bf16 lo) such that hi + lo ≈ x to ~2^-17 relative."""
    hi = x_f32.astype(jnp.bfloat16)
    lo = (x_f32 - hi.astype(jnp.float32)).astype(jnp.bfloat16)
    return hi, lo


def _bilinear_matmul_kernel(zh_ref, zl_ref, wh_ref, wl_ref, b_ref, o_ref, acc_ref):
    k = pl.program_id(2)

    @pl.when(k == 0)
    def _init():
        acc_ref[...] = jnp.zeros_like(acc_ref)

    zh = zh_ref[...]          # (bn, bk) bf16
    zl = zl_ref[...]          # (bn, bk) bf16
    wh = wh_ref[...]          # (bk, bo) bf16
    wl = wl_ref[...]          # (bk, bo) bf16

    # Three native bf16 MXU passes, fp32 accumulation (zl@wl dropped, ~2^-18).
    part = jnp.dot(zh, wh, preferred_element_type=jnp.float32)
    part += jnp.dot(zh, wl, preferred_element_type=jnp.float32)
    part += jnp.dot(zl, wh, preferred_element_type=jnp.float32)
    acc_ref[...] += part

    @pl.when(k == pl.num_programs(2) - 1)
    def _finalize():
        # Bias added once per output tile, in the epilogue only.
        o_ref[...] = acc_ref[...] + b_ref[...]


def bilinear_pallas(x1, x2, weight, bias=None, *,
                    block_n=128, block_o=128, block_k=1024):
    """y[n, o] = sum_{i,j} bf16(x1)[n, i] * W[o, i, j] * bf16(x2)[n, j] + b[o]."""
    n, in1 = x1.shape
    n2, in2 = x2.shape
    assert n == n2
    out_f = weight.shape[0]
    assert weight.shape == (out_f, in1, in2)
    k_total = in1 * in2

    # --- forward semantics of the module ------------------------------------
    # bf16cutfp on activations: truncate values to bf16, then fp32 math.
    x1b = x1.astype(jnp.bfloat16).astype(jnp.float32)
    x2b = x2.astype(jnp.bfloat16).astype(jnp.float32)
    # Weight stays un-truncated fp32 (module never uses its bf16 copy).
    w_flat = weight.astype(jnp.float32).reshape(out_f, k_total).T      # (K, O)

    # Per-row outer product; products of two bf16 values are exact in fp32.
    z = (x1b[:, :, None] * x2b[:, None, :]).reshape(n, k_total)        # (N, K)

    zh, zl = _split_hi_lo(z)
    wh, wl = _split_hi_lo(w_flat)

    if bias is None:
        bias = jnp.zeros((out_f,), jnp.float32)
    bias2d = bias.astype(jnp.float32).reshape(1, out_f)

    # --- tile sizes (last two block dims must be (8,128)-aligned or full) ---
    bn = block_n if n >= block_n else _round_up(n, 8)
    bk = block_k if k_total >= block_k else _round_up(k_total, 128)
    bo = block_o if out_f >= block_o else out_f

    n_pad = _round_up(n, bn)
    k_pad = _round_up(k_total, bk)
    o_pad = _round_up(out_f, bo)

    zh = jnp.pad(zh, ((0, n_pad - n), (0, k_pad - k_total)))
    zl = jnp.pad(zl, ((0, n_pad - n), (0, k_pad - k_total)))
    wh = jnp.pad(wh, ((0, k_pad - k_total), (0, o_pad - out_f)))
    wl = jnp.pad(wl, ((0, k_pad - k_total), (0, o_pad - out_f)))
    bias2d = jnp.pad(bias2d, ((0, 0), (0, o_pad - out_f)))

    grid = (n_pad // bn, o_pad // bo, k_pad // bk)

    out = pl.pallas_call(
        _bilinear_matmul_kernel,
        out_shape=jax.ShapeDtypeStruct((n_pad, o_pad), jnp.float32),
        grid_spec=pltpu.PrefetchScalarGridSpec(
            num_scalar_prefetch=0,
            grid=grid,
            in_specs=[
                pl.BlockSpec((bn, bk), lambda i, j, kk: (i, kk)),   # zh
                pl.BlockSpec((bn, bk), lambda i, j, kk: (i, kk)),   # zl
                pl.BlockSpec((bk, bo), lambda i, j, kk: (kk, j)),   # wh
                pl.BlockSpec((bk, bo), lambda i, j, kk: (kk, j)),   # wl
                pl.BlockSpec((1, bo), lambda i, j, kk: (0, j)),     # bias
            ],
            out_specs=pl.BlockSpec((bn, bo), lambda i, j, kk: (i, j)),
            scratch_shapes=[pltpu.VMEM((bn, bo), jnp.float32)],
        ),
        compiler_params=pltpu.CompilerParams(
            dimension_semantics=("parallel", "parallel", "arbitrary"),
        ),
    )(zh, zl, wh, wl, bias2d)

    return out[:n, :out_f]


def _reference(x1, x2, weight, bias):
    x1b = x1.astype(jnp.bfloat16).astype(jnp.float32)
    x2b = x2.astype(jnp.bfloat16).astype(jnp.float32)
    y = jnp.einsum("ni,oij,nj->no", x1b, weight.astype(jnp.float32), x2b,
                   precision=jax.lax.Precision.HIGHEST)
    return y + bias[None, :]


if __name__ == "__main__":
    # Small shapes consistent with the module's (N, in1)/(N, in2) -> (N, out).
    N, IN1, IN2, OUT = 8, 32, 24, 16

    key = jax.random.PRNGKey(0)
    k_w, k_b, k_x1, k_x2 = jax.random.split(key, 4)

    # Deterministic init mirroring reset_parameters(): uniform(-stdv, stdv),
    # stdv = 1 / sqrt(in1_features).
    stdv = 1.0 / math.sqrt(IN1)
    weight = jax.random.uniform(k_w, (OUT, IN1, IN2), jnp.float32,
                                minval=-stdv, maxval=stdv)
    bias = jax.random.uniform(k_b, (OUT,), jnp.float32,
                              minval=-stdv, maxval=stdv)

    x1 = jax.random.normal(k_x1, (N, IN1), jnp.float32)
    x2 = jax.random.normal(k_x2, (N, IN2), jnp.float32)

    out = jax.jit(bilinear_pallas)(x1, x2, weight, bias)
    out = jax.block_until_ready(out)

    ref = _reference(x1, x2, weight, bias)
    assert out.shape == (N, OUT) and out.dtype == jnp.float32
    max_err = jnp.max(jnp.abs(out - ref))
    assert jnp.allclose(out, ref, atol=1e-3, rtol=1e-3), \
        f"max abs err = {max_err}"

    print("KERNEL_OK")
</pallas_src>

<mosaic_0001>
module attributes {stable_mosaic.version = 11 : i64} {
  func.func @_bilinear_matmul_kernel(%arg0: i32, %arg1: i32, %arg2: i32, %arg3: memref<8x768xbf16, #tpu.memory_space<vmem>>, %arg4: memref<8x768xbf16, #tpu.memory_space<vmem>>, %arg5: memref<768x16xbf16, #tpu.memory_space<vmem>>, %arg6: memref<768x16xbf16, #tpu.memory_space<vmem>>, %arg7: memref<1x16xf32, #tpu.memory_space<vmem>>, %arg8: memref<8x16xf32, #tpu.memory_space<vmem>>, %arg9: memref<8x16xf32, #tpu.memory_space<vmem>>) attributes {dimension_semantics = [#tpu.dimension_semantics<parallel>, #tpu.dimension_semantics<parallel>, #tpu.dimension_semantics<arbitrary>], iteration_bounds = array<i64: 1, 1, 1>, scalar_prefetch = 0 : i64, scratch_operands = 1 : i64, tpu.core_type = #tpu.core_type<tc>, window_params = [{transform_indices = @transform_0, window_bounds = array<i64: 8, 768>}, {transform_indices = @transform_1, window_bounds = array<i64: 8, 768>}, {transform_indices = @transform_2, window_bounds = array<i64: 768, 16>}, {transform_indices = @transform_3, window_bounds = array<i64: 768, 16>}, {transform_indices = @transform_4, window_bounds = array<i64: 1, 16>}, {transform_indices = @transform_5, window_bounds = array<i64: 8, 16>}]} {
    %c0_i32 = arith.constant 0 : i32
    %0 = arith.cmpi eq, %arg2, %c0_i32 : i32
    %1 = arith.extui %0 : i1 to i32
    %c0_i32_0 = arith.constant 0 : i32
    %2 = arith.cmpi ne, %1, %c0_i32_0 : i32
    scf.if %2 {
      %cst_16 = arith.constant 0.000000e+00 : f32
      %18 = vector.broadcast %cst_16 : f32 to vector<8x16xf32>
      %c0_17 = arith.constant 0 : index
      %c0_18 = arith.constant 0 : index
      %19 = vector.load %arg9[%c0_17, %c0_18] : memref<8x16xf32, #tpu.memory_space<vmem>>, vector<8x16xf32>
      tpu.vector_store %arg9[%c0_17, %c0_18], %18 {strides = array<i32>} : memref<8x16xf32, #tpu.memory_space<vmem>>, vector<8x16xf32>,
    } else {
    }
    %c0 = arith.constant 0 : index
    %c0_1 = arith.constant 0 : index
    %3 = vector.load %arg3[%c0, %c0_1] : memref<8x768xbf16, #tpu.memory_space<vmem>>, vector<8x768xbf16>
    %c0_2 = arith.constant 0 : index
    %c0_3 = arith.constant 0 : index
    %4 = vector.load %arg4[%c0_2, %c0_3] : memref<8x768xbf16, #tpu.memory_space<vmem>>, vector<8x768xbf16>
    %c0_4 = arith.constant 0 : index
    %c0_5 = arith.constant 0 : index
    %5 = vector.load %arg5[%c0_4, %c0_5] : memref<768x16xbf16, #tpu.memory_space<vmem>>, vector<768x16xbf16>
    %c0_6 = arith.constant 0 : index
    %c0_7 = arith.constant 0 : index
    %6 = vector.load %arg6[%c0_6, %c0_7] : memref<768x16xbf16, #tpu.memory_space<vmem>>, vector<768x16xbf16>
    %cst = arith.constant dense<0.000000e+00> : vector<8x16xf32>
    %7 = tpu.matmul %3, %5, %cst {dimension_numbers = #tpu.dot_dimension_numbers<[1], [0], [0], [1], [0, 0, 1, 1], [], []>} : vector<8x768xbf16>, vector<768x16xbf16>, vector<8x16xf32> -> vector<8x16xf32>
    %cst_8 = arith.constant dense<0.000000e+00> : vector<8x16xf32>
    %8 = tpu.matmul %3, %6, %cst_8 {dimension_numbers = #tpu.dot_dimension_numbers<[1], [0], [0], [1], [0, 0, 1, 1], [], []>} : vector<8x768xbf16>, vector<768x16xbf16>, vector<8x16xf32> -> vector<8x16xf32>
    %9 = arith.addf %7, %8 : vector<8x16xf32>
    %cst_9 = arith.constant dense<0.000000e+00> : vector<8x16xf32>
    %10 = tpu.matmul %4, %5, %cst_9 {dimension_numbers = #tpu.dot_dimension_numbers<[1], [0], [0], [1], [0, 0, 1, 1], [], []>} : vector<8x768xbf16>, vector<768x16xbf16>, vector<8x16xf32> -> vector<8x16xf32>
    %11 = arith.addf %9, %10 : vector<8x16xf32>
    %c0_10 = arith.constant 0 : index
    %c0_11 = arith.constant 0 : index
    %12 = vector.load %arg9[%c0_10, %c0_11] : memref<8x16xf32, #tpu.memory_space<vmem>>, vector<8x16xf32>
    %13 = arith.addf %12, %11 : vector<8x16xf32>
    %c0_12 = arith.constant 0 : index
    %c0_13 = arith.constant 0 : index
    %14 = vector.load %arg9[%c0_12, %c0_13] : memref<8x16xf32, #tpu.memory_space<vmem>>, vector<8x16xf32>
    tpu.vector_store %arg9[%c0_12, %c0_13], %13 {strides = array<i32>} : memref<8x16xf32, #tpu.memory_space<vmem>>, vector<8x16xf32>,
    %c0_i32_14 = arith.constant 0 : i32
    %15 = arith.cmpi eq, %arg2, %c0_i32_14 : i32
    %16 = arith.extui %15 : i1 to i32
    %c0_i32_15 = arith.constant 0 : i32
    %17 = arith.cmpi ne, %16, %c0_i32_15 : i32
    scf.if %17 {
      %c0_16 = arith.constant 0 : index
      %c0_17 = arith.constant 0 : index
      %18 = vector.load %arg9[%c0_16, %c0_17] : memref<8x16xf32, #tpu.memory_space<vmem>>, vector<8x16xf32>
      %c0_18 = arith.constant 0 : index
      %c0_19 = arith.constant 0 : index
      %19 = vector.load %arg7[%c0_18, %c0_19] : memref<1x16xf32, #tpu.memory_space<vmem>>, vector<1x16xf32>
      %20 = vector.broadcast %19 : vector<1x16xf32> to vector<8x16xf32>
      %21 = arith.addf %18, %20 : vector<8x16xf32>
      %c0_20 = arith.constant 0 : index
      %c0_21 = arith.constant 0 : index
      %22 = vector.load %arg8[%c0_20, %c0_21] : memref<8x16xf32, #tpu.memory_space<vmem>>, vector<8x16xf32>
      tpu.vector_store %arg8[%c0_20, %c0_21], %21 {strides = array<i32>} : memref<8x16xf32, #tpu.memory_space<vmem>>, vector<8x16xf32>,
    } else {
    }
    return
  }
  func.func @transform_0(%arg0: i32, %arg1: i32, %arg2: i32) -> (i32, i32) {
    %c0_i32 = arith.constant 0 : i32
    return %arg0, %arg2 : i32, i32
  }
  func.func @transform_1(%arg0: i32, %arg1: i32, %arg2: i32) -> (i32, i32) {
    %c0_i32 = arith.constant 0 : i32
    return %arg0, %arg2 : i32, i32
  }
  func.func @transform_2(%arg0: i32, %arg1: i32, %arg2: i32) -> (i32, i32) {
    %c0_i32 = arith.constant 0 : i32
    return %arg2, %arg1 : i32, i32
  }
  func.func @transform_3(%arg0: i32, %arg1: i32, %arg2: i32) -> (i32, i32) {
    %c0_i32 = arith.constant 0 : i32
    return %arg2, %arg1 : i32, i32
  }
  func.func @transform_4(%arg0: i32, %arg1: i32, %arg2: i32) -> (i32, i32) {
    %c0_i32 = arith.constant 0 : i32
    %c0_i32_0 = arith.constant 0 : i32
    return %c0_i32, %arg1 : i32, i32
  }
  func.func @transform_5(%arg0: i32, %arg1: i32, %arg2: i32) -> (i32, i32) {
    %c0_i32 = arith.constant 0 : i32
    return %arg0, %arg1 : i32, i32
  }
}

</mosaic_0001>

<llo_original>
// kernel: bilinear_pallas.1
$region0: #{bilinear_pallas.1}
  #allocation0 [shape = 'u32[]', space=smem, size = 0x4, offset = 0x4, fixed_abs, tag = 'smem constant byte address 0x4 - core index']
  #allocation1 [shape = 'u32[144,128]{1,0:T(1,128)}', space=vmem, size = 0x12000, scoped, tag = 'internal scratch']
  #allocation2 [shape = 'f32[8,16]{1,0:T(8,128)}', space=vmem, size = 0x1000, scoped, tag = 'scratch operand']
  %s0 = inlined_call_operand.vmem [shape: bf16[8,768], index: 0, kind: input, shape index: {}]
  %s1 = inlined_call_operand.vmem [shape: bf16[8,768], index: 1, kind: input, shape index: {}]
  %s2 = inlined_call_operand.vmem [shape: bf16[768,16], index: 2, kind: input, shape index: {}]
  %s3 = inlined_call_operand.vmem [shape: bf16[768,16], index: 3, kind: input, shape index: {}]
  %s4 = inlined_call_operand.vmem [shape: f32[1,16], index: 4, kind: input, shape index: {}]
  %s5 = inlined_call_operand.hbm [shape: f32[8,16], index: 5, kind: output, shape index: {}]
  %s6 = sld [smem:[#allocation0]]
  $region38: #{bilinear_pallas.1} parent=0
    _
  %s8 = ssub.s32 1, %s6
  %s9 = scalar_select 0, %s8, %s6
  $region1: #{bilinear_pallas.1} parent=0
    #allocation3 [shape = 'u8[4096]{0}', space=vmem, size = 0x1000, scoped, tag = 'output window, operand 0, single buffered']
    #allocation4 [shape = 's32[1]{0}', space=sflag, size = 0x4, scoped, tag = 'scoped memory for bilinear_pallas.1']
    %10 = vsyncpa [#allocation4], 0
    // Predicated region
    $region2: #{bilinear_pallas.1} parent=1 // pred_check
      _
    $region3: #{bilinear_pallas.1} parent=1 // pred_check_branch
      %12 = sbr.rel (0) target = $region5
    $region4: #{bilinear_pallas.1} parent=1 // pred_region
      _
    $region5: #{bilinear_pallas.1} parent=1 // pred_fallthru
      _
    // Predicated region
    $region6: #{bilinear_pallas.1} parent=1 // pred_check
      _
    $region7: #{bilinear_pallas.1} parent=1 // pred_check_branch
      %14 = sbr.rel (0) target = $region9
    $region8: #{bilinear_pallas.1} parent=1 // pred_region
      _
    $region9: #{bilinear_pallas.1} parent=1 // pred_fallthru
      _
    // Predicated region
    $region10: #{bilinear_pallas.1} parent=1 // pred_check
      _
    $region11: #{bilinear_pallas.1} parent=1 // pred_check_branch
      %16 = sbr.rel (0) target = $region13
    $region12: #{bilinear_pallas.1} parent=1 // pred_region
      _
    $region13: #{bilinear_pallas.1} parent=1 // pred_fallthru
      _
    // Predicated region
    $region14: #{bilinear_pallas.1} parent=1 // pred_check
      _
    $region15: #{bilinear_pallas.1} parent=1 // pred_check_branch
      %18 = sbr.rel (0) target = $region17
    $region16: #{bilinear_pallas.1} parent=1 // pred_region
      _
    $region17: #{bilinear_pallas.1} parent=1 // pred_fallthru
      _
    // Predicated region
    $region18: #{bilinear_pallas.1} parent=1 // pred_check
      _
    $region19: #{bilinear_pallas.1} parent=1 // pred_check_branch
      %20 = sbr.rel (0) target = $region21
    $region20: #{bilinear_pallas.1} parent=1 // pred_region
      _
    $region21: #{bilinear_pallas.1} parent=1 // pred_fallthru
      _
    %p22 = scmp.eq.s32.totalorder 0, 0
    // Predicated region
    $region22: #{bilinear_pallas.1} parent=1 // pred_check
      %p23 = pneg %p22
    $region23: #{bilinear_pallas.1} parent=1 // pred_check_branch
      %25 = sbr.rel (%p23) target = $region25
    $region24: #{bilinear_pallas.1} parent=1 // pred_region
      %vm26 = vcmask 130048
      %27 = vst.msk [vmem:[#allocation2] sm:$0xff] %vm26, 0.0
    $region25: #{bilinear_pallas.1} parent=1 // pred_fallthru
      _
    %v28 = vld [vmem:[%s0] sm:$0xff]
    %v29 = vld [vmem:[%s0 + $0x8] sm:$0xff]
    %v30 = vld [vmem:[%s0 + $0x10] sm:$0xff]
    %v31 = vld [vmem:[%s1] sm:$0xff]
    %v32 = vld [vmem:[%s1 + $0x8] sm:$0xff]
    %v33 = vld [vmem:[%s1 + $0x10] sm:$0xff]
    %v34 = vld [vmem:[%s2] sm:$0xf]
    %v35 = vld [vmem:[%s2 + $0x4] sm:$0xf]
    %v36 = vld [vmem:[%s2 + $0x8] sm:$0xf]
    %v37 = vld [vmem:[%s2 + $0xc] sm:$0xf]
    %v38 = vld [vmem:[%s2 + $0x10] sm:$0xf]
    %v39 = vld [vmem:[%s2 + $0x14] sm:$0xf]
    %v40 = vld [vmem:[%s2 + $0x18] sm:$0xf]
    %v41 = vld [vmem:[%s2 + $0x1c] sm:$0xf]
    %v42 = vld [vmem:[%s2 + $0x20] sm:$0xf]
    %v43 = vld [vmem:[%s2 + $0x24] sm:$0xf]
    %v44 = vld [vmem:[%s2 + $0x28] sm:$0xf]
    %v45 = vld [vmem:[%s2 + $0x2c] sm:$0xf]
    %v46 = vld [vmem:[%s2 + $0x30] sm:$0xf]
    %v47 = vld [vmem:[%s2 + $0x34] sm:$0xf]
    %v48 = vld [vmem:[%s2 + $0x38] sm:$0xf]
    %v49 = vld [vmem:[%s2 + $0x3c] sm:$0xf]
    %v50 = vld [vmem:[%s2 + $0x40] sm:$0xf]
    %v51 = vld [vmem:[%s2 + $0x44] sm:$0xf]
    %v52 = vld [vmem:[%s2 + $0x48] sm:$0xf]
    %v53 = vld [vmem:[%s2 + $0x4c] sm:$0xf]
    %v54 = vld [vmem:[%s2 + $0x50] sm:$0xf]
    %v55 = vld [vmem:[%s2 + $0x54] sm:$0xf]
    %v56 = vld [vmem:[%s2 + $0x58] sm:$0xf]
    %v57 = vld [vmem:[%s2 + $0x5c] sm:$0xf]
    %v58 = vld [vmem:[%s2 + $0x60] sm:$0xf]
    %v59 = vld [vmem:[%s2 + $0x64] sm:$0xf]
    %v60 = vld [vmem:[%s2 + $0x68] sm:$0xf]
    %v61 = vld [vmem:[%s2 + $0x6c] sm:$0xf]
    %v62 = vld [vmem:[%s2 + $0x70] sm:$0xf]
    %v63 = vld [vmem:[%s2 + $0x74] sm:$0xf]
    %v64 = vld [vmem:[%s2 + $0x78] sm:$0xf]
    %v65 = vld [vmem:[%s2 + $0x7c] sm:$0xf]
    %v66 = vld [vmem:[%s2 + $0x80] sm:$0xf]
    %v67 = vld [vmem:[%s2 + $0x84] sm:$0xf]
    %v68 = vld [vmem:[%s2 + $0x88] sm:$0xf]
    %v69 = vld [vmem:[%s2 + $0x8c] sm:$0xf]
    %v70 = vld [vmem:[%s2 + $0x90] sm:$0xf]
    %v71 = vld [vmem:[%s2 + $0x94] sm:$0xf]
    %v72 = vld [vmem:[%s2 + $0x98] sm:$0xf]
    %v73 = vld [vmem:[%s2 + $0x9c] sm:$0xf]
    %v74 = vld [vmem:[%s2 + $0xa0] sm:$0xf]
    %v75 = vld [vmem:[%s2 + $0xa4] sm:$0xf]
    %v76 = vld [vmem:[%s2 + $0xa8] sm:$0xf]
    %v77 = vld [vmem:[%s2 + $0xac] sm:$0xf]
    %v78 = vld [vmem:[%s2 + $0xb0] sm:$0xf]
    %v79 = vld [vmem:[%s2 + $0xb4] sm:$0xf]
    %v80 = vld [vmem:[%s2 + $0xb8] sm:$0xf]
    %v81 = vld [vmem:[%s2 + $0xbc] sm:$0xf]
    %v82 = vld [vmem:[%s2 + $0xc0] sm:$0xf]
    %v83 = vld [vmem:[%s2 + $0xc4] sm:$0xf]
    %v84 = vld [vmem:[%s2 + $0xc8] sm:$0xf]
    %v85 = vld [vmem:[%s2 + $0xcc] sm:$0xf]
    %v86 = vld [vmem:[%s2 + $0xd0] sm:$0xf]
    %v87 = vld [vmem:[%s2 + $0xd4] sm:$0xf]
    %v88 = vld [vmem:[%s2 + $0xd8] sm:$0xf]
    %v89 = vld [vmem:[%s2 + $0xdc] sm:$0xf]
    %v90 = vld [vmem:[%s2 + $0xe0] sm:$0xf]
    %v91 = vld [vmem:[%s2 + $0xe4] sm:$0xf]
    %v92 = vld [vmem:[%s2 + $0xe8] sm:$0xf]
    %v93 = vld [vmem:[%s2 + $0xec] sm:$0xf]
    %v94 = vld [vmem:[%s2 + $0xf0] sm:$0xf]
    %v95 = vld [vmem:[%s2 + $0xf4] sm:$0xf]
    %v96 = vld [vmem:[%s2 + $0xf8] sm:$0xf]
    %v97 = vld [vmem:[%s2 + $0xfc] sm:$0xf]
    %v98 = vld [vmem:[%s2 + $0x100] sm:$0xf]
    %v99 = vld [vmem:[%s2 + $0x104] sm:$0xf]
    %v100 = vld [vmem:[%s2 + $0x108] sm:$0xf]
    %v101 = vld [vmem:[%s2 + $0x10c] sm:$0xf]
    %v102 = vld [vmem:[%s2 + $0x110] sm:$0xf]
    %v103 = vld [vmem:[%s2 + $0x114] sm:$0xf]
    %v104 = vld [vmem:[%s2 + $0x118] sm:$0xf]
    %v105 = vld [vmem:[%s2 + $0x11c] sm:$0xf]
    %v106 = vld [vmem:[%s2 + $0x120] sm:$0xf]
    %v107 = vld [vmem:[%s2 + $0x124] sm:$0xf]
    %v108 = vld [vmem:[%s2 + $0x128] sm:$0xf]
    %v109 = vld [vmem:[%s2 + $0x12c] sm:$0xf]
    %v110 = vld [vmem:[%s2 + $0x130] sm:$0xf]
    %v111 = vld [vmem:[%s2 + $0x134] sm:$0xf]
    %v112 = vld [vmem:[%s2 + $0x138] sm:$0xf]
    %v113 = vld [vmem:[%s2 + $0x13c] sm:$0xf]
    %v114 = vld [vmem:[%s2 + $0x140] sm:$0xf]
    %v115 = vld [vmem:[%s2 + $0x144] sm:$0xf]
    %v116 = vld [vmem:[%s2 + $0x148] sm:$0xf]
    %v117 = vld [vmem:[%s2 + $0x14c] sm:$0xf]
    %v118 = vld [vmem:[%s2 + $0x150] sm:$0xf]
    %v119 = vld [vmem:[%s2 + $0x154] sm:$0xf]
    %v120 = vld [vmem:[%s2 + $0x158] sm:$0xf]
    %v121 = vld [vmem:[%s2 + $0x15c] sm:$0xf]
    %v122 = vld [vmem:[%s2 + $0x160] sm:$0xf]
    %v123 = vld [vmem:[%s2 + $0x164] sm:$0xf]
    %v124 = vld [vmem:[%s2 + $0x168] sm:$0xf]
    %v125 = vld [vmem:[%s2 + $0x16c] sm:$0xf]
    %v126 = vld [vmem:[%s2 + $0x170] sm:$0xf]
    %v127 = vld [vmem:[%s2 + $0x174] sm:$0xf]
    %v128 = vld [vmem:[%s2 + $0x178] sm:$0xf]
    %v129 = vld [vmem:[%s2 + $0x17c] sm:$0xf]
    %v130 = vld [vmem:[%s3] sm:$0xf]
    %v131 = vld [vmem:[%s3 + $0x4] sm:$0xf]
    %v132 = vld [vmem:[%s3 + $0x8] sm:$0xf]
    %v133 = vld [vmem:[%s3 + $0xc] sm:$0xf]
    %v134 = vld [vmem:[%s3 + $0x10] sm:$0xf]
    %v135 = vld [vmem:[%s3 + $0x14] sm:$0xf]
    %v136 = vld [vmem:[%s3 + $0x18] sm:$0xf]
    %v137 = vld [vmem:[%s3 + $0x1c] sm:$0xf]
    %v138 = vld [vmem:[%s3 + $0x20] sm:$0xf]
    %v139 = vld [vmem:[%s3 + $0x24] sm:$0xf]
    %v140 = vld [vmem:[%s3 + $0x28] sm:$0xf]
    %v141 = vld [vmem:[%s3 + $0x2c] sm:$0xf]
    %v142 = vld [vmem:[%s3 + $0x30] sm:$0xf]
    %v143 = vld [vmem:[%s3 + $0x34] sm:$0xf]
    %v144 = vld [vmem:[%s3 + $0x38] sm:$0xf]
    %v145 = vld [vmem:[%s3 + $0x3c] sm:$0xf]
    %v146 = vld [vmem:[%s3 + $0x40] sm:$0xf]
    %v147 = vld [vmem:[%s3 + $0x44] sm:$0xf]
    %v148 = vld [vmem:[%s3 + $0x48] sm:$0xf]
    %v149 = vld [vmem:[%s3 + $0x4c] sm:$0xf]
    %v150 = vld [vmem:[%s3 + $0x50] sm:$0xf]
    %v151 = vld [vmem:[%s3 + $0x54] sm:$0xf]
    %v152 = vld [vmem:[%s3 + $0x58] sm:$0xf]
    %v153 = vld [vmem:[%s3 + $0x5c] sm:$0xf]
    %v154 = vld [vmem:[%s3 + $0x60] sm:$0xf]
    %v155 = vld [vmem:[%s3 + $0x64] sm:$0xf]
    %v156 = vld [vmem:[%s3 + $0x68] sm:$0xf]
    %v157 = vld [vmem:[%s3 + $0x6c] sm:$0xf]
    %v158 = vld [vmem:[%s3 + $0x70] sm:$0xf]
    %v159 = vld [vmem:[%s3 + $0x74] sm:$0xf]
    %v160 = vld [vmem:[%s3 + $0x78] sm:$0xf]
    %v161 = vld [vmem:[%s3 + $0x7c] sm:$0xf]
    %v162 = vld [vmem:[%s3 + $0x80] sm:$0xf]
    %v163 = vld [vmem:[%s3 + $0x84] sm:$0xf]
    %v164 = vld [vmem:[%s3 + $0x88] sm:$0xf]
    %v165 = vld [vmem:[%s3 + $0x8c] sm:$0xf]
    %v166 = vld [vmem:[%s3 + $0x90] sm:$0xf]
    %v167 = vld [vmem:[%s3 + $0x94] sm:$0xf]
    %v168 = vld [vmem:[%s3 + $0x98] sm:$0xf]
    %v169 = vld [vmem:[%s3 + $0x9c] sm:$0xf]
    %v170 = vld [vmem:[%s3 + $0xa0] sm:$0xf]
    %v171 = vld [vmem:[%s3 + $0xa4] sm:$0xf]
    %v172 = vld [vmem:[%s3 + $0xa8] sm:$0xf]
    %v173 = vld [vmem:[%s3 + $0xac] sm:$0xf]
    %v174 = vld [vmem:[%s3 + $0xb0] sm:$0xf]
    %v175 = vld [vmem:[%s3 + $0xb4] sm:$0xf]
    %v176 = vld [vmem:[%s3 + $0xb8] sm:$0xf]
    %v177 = vld [vmem:[%s3 + $0xbc] sm:$0xf]
    %v178 = vld [vmem:[%s3 + $0xc0] sm:$0xf]
    %v179 = vld [vmem:[%s3 + $0xc4] sm:$0xf]
    %v180 = vld [vmem:[%s3 + $0xc8] sm:$0xf]
    %v181 = vld [vmem:[%s3 + $0xcc] sm:$0xf]
    %v182 = vld [vmem:[%s3 + $0xd0] sm:$0xf]
    %v183 = vld [vmem:[%s3 + $0xd4] sm:$0xf]
    %v184 = vld [vmem:[%s3 + $0xd8] sm:$0xf]
    %v185 = vld [vmem:[%s3 + $0xdc] sm:$0xf]
    %v186 = vld [vmem:[%s3 + $0xe0] sm:$0xf]
    %v187 = vld [vmem:[%s3 + $0xe4] sm:$0xf]
    %v188 = vld [vmem:[%s3 + $0xe8] sm:$0xf]
    %v189 = vld [vmem:[%s3 + $0xec] sm:$0xf]
    %v190 = vld [vmem:[%s3 + $0xf0] sm:$0xf]
    %v191 = vld [vmem:[%s3 + $0xf4] sm:$0xf]
    %v192 = vld [vmem:[%s3 + $0xf8] sm:$0xf]
    %v193 = vld [vmem:[%s3 + $0xfc] sm:$0xf]
    %v194 = vld [vmem:[%s3 + $0x100] sm:$0xf]
    %v195 = vld [vmem:[%s3 + $0x104] sm:$0xf]
    %v196 = vld [vmem:[%s3 + $0x108] sm:$0xf]
    %v197 = vld [vmem:[%s3 + $0x10c] sm:$0xf]
    %v198 = vld [vmem:[%s3 + $0x110] sm:$0xf]
    %v199 = vld [vmem:[%s3 + $0x114] sm:$0xf]
    %v200 = vld [vmem:[%s3 + $0x118] sm:$0xf]
    %v201 = vld [vmem:[%s3 + $0x11c] sm:$0xf]
    %v202 = vld [vmem:[%s3 + $0x120] sm:$0xf]
    %v203 = vld [vmem:[%s3 + $0x124] sm:$0xf]
    %v204 = vld [vmem:[%s3 + $0x128] sm:$0xf]
    %v205 = vld [vmem:[%s3 + $0x12c] sm:$0xf]
    %v206 = vld [vmem:[%s3 + $0x130] sm:$0xf]
    %v207 = vld [vmem:[%s3 + $0x134] sm:$0xf]
    %v208 = vld [vmem:[%s3 + $0x138] sm:$0xf]
    %v209 = vld [vmem:[%s3 + $0x13c] sm:$0xf]
    %v210 = vld [vmem:[%s3 + $0x140] sm:$0xf]
    %v211 = vld [vmem:[%s3 + $0x144] sm:$0xf]
    %v212 = vld [vmem:[%s3 + $0x148] sm:$0xf]
    %v213 = vld [vmem:[%s3 + $0x14c] sm:$0xf]
    %v214 = vld [vmem:[%s3 + $0x150] sm:$0xf]
    %v215 = vld [vmem:[%s3 + $0x154] sm:$0xf]
    %v216 = vld [vmem:[%s3 + $0x158] sm:$0xf]
    %v217 = vld [vmem:[%s3 + $0x15c] sm:$0xf]
    %v218 = vld [vmem:[%s3 + $0x160] sm:$0xf]
    %v219 = vld [vmem:[%s3 + $0x164] sm:$0xf]
    %v220 = vld [vmem:[%s3 + $0x168] sm:$0xf]
    %v221 = vld [vmem:[%s3 + $0x16c] sm:$0xf]
    %v222 = vld [vmem:[%s3 + $0x170] sm:$0xf]
    %v223 = vld [vmem:[%s3 + $0x174] sm:$0xf]
    %v224 = vld [vmem:[%s3 + $0x178] sm:$0xf]
    %v225 = vld [vmem:[%s3 + $0x17c] sm:$0xf]
    %v229 = vunpack.c.l.b16 %v28
    %v230 = vunpack.c.h.b16 %v28
    %v231 = vunpack.c.l.b16 %v29
    %v232 = vunpack.c.h.b16 %v29
    %v233 = vunpack.c.l.b16 %v30
    %v234 = vunpack.c.h.b16 %v30
    %v235 = vpack.c.b16 %v229, %v229
    %v236 = vpack.c.b16 %v230, %v230
    %v237 = vpack.c.b16 %v231, %v231
    %v238 = vpack.c.b16 %v232, %v232
    %v239 = vpack.c.b16 %v233, %v233
    %v240 = vpack.c.b16 %v234, %v234
    %v343 = vunpack.c.l.b16 %v130
    %v344 = vunpack.c.l.b16 %v131
    %v345 = vunpack.c.l.b16 %v132
    %v346 = vunpack.c.l.b16 %v133
    %v347 = vunpack.c.l.b16 %v134
    %v348 = vunpack.c.l.b16 %v135
    %v349 = vunpack.c.l.b16 %v136
    %v350 = vunpack.c.l.b16 %v137
    %v351 = vunpack.c.l.b16 %v138
    %v352 = vunpack.c.l.b16 %v139
    %v353 = vunpack.c.l.b16 %v140
    %v354 = vunpack.c.l.b16 %v141
    %v355 = vunpack.c.l.b16 %v142
    %v356 = vunpack.c.l.b16 %v143
    %v357 = vunpack.c.l.b16 %v144
    %v358 = vunpack.c.l.b16 %v145
    %v359 = vunpack.c.l.b16 %v146
    %v360 = vunpack.c.l.b16 %v147
    %v361 = vunpack.c.l.b16 %v148
    %v362 = vunpack.c.l.b16 %v149
    %v363 = vunpack.c.l.b16 %v150
    %v364 = vunpack.c.l.b16 %v151
    %v365 = vunpack.c.l.b16 %v152
    %v366 = vunpack.c.l.b16 %v153
    %v367 = vunpack.c.l.b16 %v154
    %v368 = vunpack.c.l.b16 %v155
    %v369 = vunpack.c.l.b16 %v156
    %v370 = vunpack.c.l.b16 %v157
    %v371 = vunpack.c.l.b16 %v158
    %v372 = vunpack.c.l.b16 %v159
    %v373 = vunpack.c.l.b16 %v160
    %v374 = vunpack.c.l.b16 %v161
    %v375 = vunpack.c.l.b16 %v162
    %v376 = vunpack.c.l.b16 %v163
    %v377 = vunpack.c.l.b16 %v164
    %v378 = vunpack.c.l.b16 %v165
    %v379 = vunpack.c.l.b16 %v166
    %v380 = vunpack.c.l.b16 %v167
    %v381 = vunpack.c.l.b16 %v168
    %v382 = vunpack.c.l.b16 %v169
    %v383 = vunpack.c.l.b16 %v170
    %v384 = vunpack.c.l.b16 %v171
    %v385 = vunpack.c.l.b16 %v172
    %v386 = vunpack.c.l.b16 %v173
    %v387 = vunpack.c.l.b16 %v174
    %v388 = vunpack.c.l.b16 %v175
    %v389 = vunpack.c.l.b16 %v176
    %v390 = vunpack.c.l.b16 %v177
    %v391 = vunpack.c.l.b16 %v178
    %v392 = vunpack.c.l.b16 %v179
    %v393 = vunpack.c.l.b16 %v180
    %v394 = vunpack.c.l.b16 %v181
    %v395 = vunpack.c.l.b16 %v182
    %v396 = vunpack.c.l.b16 %v183
    %v397 = vunpack.c.l.b16 %v184
    %v398 = vunpack.c.l.b16 %v185
    %v399 = vunpack.c.l.b16 %v186
    %v400 = vunpack.c.l.b16 %v187
    %v401 = vunpack.c.l.b16 %v188
    %v402 = vunpack.c.l.b16 %v189
    %v403 = vunpack.c.l.b16 %v190
    %v404 = vunpack.c.l.b16 %v191
    %v405 = vunpack.c.l.b16 %v192
    %v406 = vunpack.c.l.b16 %v193
    %v407 = vunpack.c.l.b16 %v194
    %v408 = vunpack.c.l.b16 %v195
    %v409 = vunpack.c.l.b16 %v196
    %v410 = vunpack.c.l.b16 %v197
    %v411 = vunpack.c.l.b16 %v198
    %v412 = vunpack.c.l.b16 %v199
    %v413 = vunpack.c.l.b16 %v200
    %v414 = vunpack.c.l.b16 %v201
    %v415 = vunpack.c.l.b16 %v202
    %v416 = vunpack.c.l.b16 %v203
    %v417 = vunpack.c.l.b16 %v204
    %v418 = vunpack.c.l.b16 %v205
    %v419 = vunpack.c.l.b16 %v206
    %v420 = vunpack.c.l.b16 %v207
    %v421 = vunpack.c.l.b16 %v208
    %v422 = vunpack.c.l.b16 %v209
    %v423 = vunpack.c.l.b16 %v210
    %v424 = vunpack.c.l.b16 %v211
    %v425 = vunpack.c.l.b16 %v212
    %v426 = vunpack.c.l.b16 %v213
    %v427 = vunpack.c.l.b16 %v214
    %v428 = vunpack.c.l.b16 %v215
    %v429 = vunpack.c.l.b16 %v216
    %v430 = vunpack.c.l.b16 %v217
    %v431 = vunpack.c.l.b16 %v218
    %v432 = vunpack.c.l.b16 %v219
    %v433 = vunpack.c.l.b16 %v220
    %v434 = vunpack.c.l.b16 %v221
    %v435 = vunpack.c.l.b16 %v222
    %v436 = vunpack.c.l.b16 %v223
    %v437 = vunpack.c.l.b16 %v224
    %v438 = vunpack.c.l.b16 %v225
    %v439 = vpack.c.b16 %v344, %v343
    %v440 = vpack.c.b16 %v346, %v345
    %v441 = vpack.c.b16 %v348, %v347
    %v442 = vpack.c.b16 %v350, %v349
    %v443 = vpack.c.b16 %v352, %v351
    %v444 = vpack.c.b16 %v354, %v353
    %v445 = vpack.c.b16 %v356, %v355
    %v446 = vpack.c.b16 %v358, %v357
    %v447 = vpack.c.b16 %v360, %v359
    %v448 = vpack.c.b16 %v362, %v361
    %v449 = vpack.c.b16 %v364, %v363
    %v450 = vpack.c.b16 %v366, %v365
    %v451 = vpack.c.b16 %v368, %v367
    %v452 = vpack.c.b16 %v370, %v369
    %v453 = vpack.c.b16 %v372, %v371
    %v454 = vpack.c.b16 %v374, %v373
    %v455 = vpack.c.b16 %v376, %v375
    %v456 = vpack.c.b16 %v378, %v377
    %v457 = vpack.c.b16 %v380, %v379
    %v458 = vpack.c.b16 %v382, %v381
    %v459 = vpack.c.b16 %v384, %v383
    %v460 = vpack.c.b16 %v386, %v385
    %v461 = vpack.c.b16 %v388, %v387
    %v462 = vpack.c.b16 %v390, %v389
    %v463 = vpack.c.b16 %v392, %v391
    %v464 = vpack.c.b16 %v394, %v393
    %v465 = vpack.c.b16 %v396, %v395
    %v466 = vpack.c.b16 %v398, %v397
    %v467 = vpack.c.b16 %v400, %v399
    %v468 = vpack.c.b16 %v402, %v401
    %v469 = vpack.c.b16 %v404, %v403
    %v470 = vpack.c.b16 %v406, %v405
    %v471 = vpack.c.b16 %v408, %v407
    %v472 = vpack.c.b16 %v410, %v409
    %v473 = vpack.c.b16 %v412, %v411
    %v474 = vpack.c.b16 %v414, %v413
    %v475 = vpack.c.b16 %v416, %v415
    %v476 = vpack.c.b16 %v418, %v417
    %v477 = vpack.c.b16 %v420, %v419
    %v478 = vpack.c.b16 %v422, %v421
    %v479 = vpack.c.b16 %v424, %v423
    %v480 = vpack.c.b16 %v426, %v425
    %v481 = vpack.c.b16 %v428, %v427
    %v482 = vpack.c.b16 %v430, %v429
    %v483 = vpack.c.b16 %v432, %v431
    %v484 = vpack.c.b16 %v434, %v433
    %v485 = vpack.c.b16 %v436, %v435
    %v486 = vpack.c.b16 %v438, %v437
    %535 = vmatprep.subr.bf16.mxu0 0
    %536 = vmatpush1.bf16.msra.mxu0 %v439
    %537 = vmatprep.subr.bf16.mxu0 0
    %538 = vmatpush1.bf16.msra.mxu0 %v440
    %539 = vmatprep.subr.bf16.mxu0 0
    %540 = vmatpush1.bf16.msra.mxu0 %v441
    %541 = vmatprep.subr.bf16.mxu0 0
    %542 = vmatpush1.bf16.msra.mxu0 %v442
    %543 = vmatprep.subr.bf16.mxu0 0
    %544 = vmatpush1.bf16.msra.mxu0 %v443
    %545 = vmatprep.subr.bf16.mxu0 0
    %546 = vmatpush1.bf16.msra.mxu0 %v444
    %547 = vmatprep.subr.bf16.mxu0 0
    %548 = vmatpush1.bf16.msra.mxu0 %v445
    %549 = vmatprep.subr.bf16.mxu0 0
    %550 = vmatpush1.bf16.msra.mxu0 %v446
    %551 = vmatprep.subr.bf16.mxu0 0
    %552 = vmatpush1.bf16.msra.mxu0 %v447
    %553 = vmatprep.subr.bf16.mxu0 0
    %554 = vmatpush1.bf16.msra.mxu0 %v448
    %555 = vmatprep.subr.bf16.mxu0 0
    %556 = vmatpush1.bf16.msra.mxu0 %v449
    %557 = vmatprep.subr.bf16.mxu0 0
    %558 = vmatpush1.bf16.msra.mxu0 %v450
    %559 = vmatprep.subr.bf16.mxu0 0
    %560 = vmatpush1.bf16.msra.mxu0 %v451
    %561 = vmatprep.subr.bf16.mxu0 0
    %562 = vmatpush1.bf16.msra.mxu0 %v452
    %563 = vmatprep.subr.bf16.mxu0 0
    %564 = vmatpush1.bf16.msra.mxu0 %v453
    %565 = vmatprep.subr.bf16.mxu0 0
    %566 = vmatpush1.bf16.msra.mxu0 %v454
    %567 = vmatprep.mubr.bf16.mxu0 %v236
    %568 = vmatmul.mubr.bf16.gmra.mrb[0].mxu0 %v235
    %v569 = vpop.f32.mrb[0].mxu0
    %v570 = vadd.f32 0.0, %v569
    %v571 = vpop.f32.mrb[0].mxu0
    %v572 = vpop.f32.mrb[0].mxu0
    %v573 = vpop.f32.mrb[0].mxu0
    %574 = vdwg.mxu0
    %575 = vmatprep.subr.bf16.mxu0 0
    %576 = vmatpush1.bf16.msra.mxu0 %v455
    %577 = vmatprep.subr.bf16.mxu0 0
    %578 = vmatpush1.bf16.msra.mxu0 %v456
    %579 = vmatprep.subr.bf16.mxu0 0
    %580 = vmatpush1.bf16.msra.mxu0 %v457
    %581 = vmatprep.subr.bf16.mxu0 0
    %582 = vmatpush1.bf16.msra.mxu0 %v458
    %583 = vmatprep.subr.bf16.mxu0 0
    %584 = vmatpush1.bf16.msra.mxu0 %v459
    %585 = vmatprep.subr.bf16.mxu0 0
    %586 = vmatpush1.bf16.msra.mxu0 %v460
    %587 = vmatprep.subr.bf16.mxu0 0
    %588 = vmatpush1.bf16.msra.mxu0 %v461
    %589 = vmatprep.subr.bf16.mxu0 0
    %590 = vmatpush1.bf16.msra.mxu0 %v462
    %591 = vmatprep.subr.bf16.mxu0 0
    %592 = vmatpush1.bf16.msra.mxu0 %v463
    %593 = vmatprep.subr.bf16.mxu0 0
    %594 = vmatpush1.bf16.msra.mxu0 %v464
    %595 = vmatprep.subr.bf16.mxu0 0
    %596 = vmatpush1.bf16.msra.mxu0 %v465
    %597 = vmatprep.subr.bf16.mxu0 0
    %598 = vmatpush1.bf16.msra.mxu0 %v466
    %599 = vmatprep.subr.bf16.mxu0 0
    %600 = vmatpush1.bf16.msra.mxu0 %v467
    %601 = vmatprep.subr.bf16.mxu0 0
    %602 = vmatpush1.bf16.msra.mxu0 %v468
    %603 = vmatprep.subr.bf16.mxu0 0
    %604 = vmatpush1.bf16.msra.mxu0 %v469
    %605 = vmatprep.subr.bf16.mxu0 0
    %606 = vmatpush1.bf16.msra.mxu0 %v470
    %607 = vmatprep.mubr.bf16.mxu0 %v238
    %608 = vmatmul.mubr.bf16.gmra.mrb[0].mxu0 %v237
    %v609 = vpop.f32.mrb[0].mxu0
    %v610 = vadd.f32 %v570, %v609
    %v611 = vpop.f32.mrb[0].mxu0
    %v612 = vpop.f32.mrb[0].mxu0
    %v613 = vpop.f32.mrb[0].mxu0
    %614 = vdwg.mxu0
    %615 = vmatprep.subr.bf16.mxu0 0
    %616 = vmatpush1.bf16.msra.mxu0 %v471
    %617 = vmatprep.subr.bf16.mxu0 0
    %618 = vmatpush1.bf16.msra.mxu0 %v472
    %619 = vmatprep.subr.bf16.mxu0 0
    %620 = vmatpush1.bf16.msra.mxu0 %v473
    %621 = vmatprep.subr.bf16.mxu0 0
    %622 = vmatpush1.bf16.msra.mxu0 %v474
    %623 = vmatprep.subr.bf16.mxu0 0
    %624 = vmatpush1.bf16.msra.mxu0 %v475
    %625 = vmatprep.subr.bf16.mxu0 0
    %626 = vmatpush1.bf16.msra.mxu0 %v476
    %627 = vmatprep.subr.bf16.mxu0 0
    %628 = vmatpush1.bf16.msra.mxu0 %v477
    %629 = vmatprep.subr.bf16.mxu0 0
    %630 = vmatpush1.bf16.msra.mxu0 %v478
    %631 = vmatprep.subr.bf16.mxu0 0
    %632 = vmatpush1.bf16.msra.mxu0 %v479
    %633 = vmatprep.subr.bf16.mxu0 0
    %634 = vmatpush1.bf16.msra.mxu0 %v480
    %635 = vmatprep.subr.bf16.mxu0 0
    %636 = vmatpush1.bf16.msra.mxu0 %v481
    %637 = vmatprep.subr.bf16.mxu0 0
    %638 = vmatpush1.bf16.msra.mxu0 %v482
    %639 = vmatprep.subr.bf16.mxu0 0
    %640 = vmatpush1.bf16.msra.mxu0 %v483
    %641 = vmatprep.subr.bf16.mxu0 0
    %642 = vmatpush1.bf16.msra.mxu0 %v484
    %643 = vmatprep.subr.bf16.mxu0 0
    %644 = vmatpush1.bf16.msra.mxu0 %v485
    %645 = vmatprep.subr.bf16.mxu0 0
    %646 = vmatpush1.bf16.msra.mxu0 %v486
    %647 = vmatprep.mubr.bf16.mxu0 %v240
    %648 = vmatmul.mubr.bf16.gmra.mrb[0].mxu0 %v239
    %v649 = vpop.f32.mrb[0].mxu0
    %v650 = vadd.f32 %v610, %v649
    %v651 = vpop.f32.mrb[0].mxu0
    %v652 = vpop.f32.mrb[0].mxu0
    %v653 = vpop.f32.mrb[0].mxu0
    %654 = vdwg.mxu0
    %v751 = vunpack.c.l.b16 %v34
    %v752 = vunpack.c.l.b16 %v35
    %v753 = vunpack.c.l.b16 %v36
    %v754 = vunpack.c.l.b16 %v37
    %v755 = vunpack.c.l.b16 %v38
    %v756 = vunpack.c.l.b16 %v39
    %v757 = vunpack.c.l.b16 %v40
    %v758 = vunpack.c.l.b16 %v41
    %v759 = vunpack.c.l.b16 %v42
    %v760 = vunpack.c.l.b16 %v43
    %v761 = vunpack.c.l.b16 %v44
    %v762 = vunpack.c.l.b16 %v45
    %v763 = vunpack.c.l.b16 %v46
    %v764 = vunpack.c.l.b16 %v47
    %v765 = vunpack.c.l.b16 %v48
    %v766 = vunpack.c.l.b16 %v49
    %v767 = vunpack.c.l.b16 %v50
    %v768 = vunpack.c.l.b16 %v51
    %v769 = vunpack.c.l.b16 %v52
    %v770 = vunpack.c.l.b16 %v53
    %v771 = vunpack.c.l.b16 %v54
    %v772 = vunpack.c.l.b16 %v55
    %v773 = vunpack.c.l.b16 %v56
    %v774 = vunpack.c.l.b16 %v57
    %v775 = vunpack.c.l.b16 %v58
    %v776 = vunpack.c.l.b16 %v59
    %v777 = vunpack.c.l.b16 %v60
    %v778 = vunpack.c.l.b16 %v61
    %v779 = vunpack.c.l.b16 %v62
    %v780 = vunpack.c.l.b16 %v63
    %v781 = vunpack.c.l.b16 %v64
    %v782 = vunpack.c.l.b16 %v65
    %v783 = vunpack.c.l.b16 %v66
    %v784 = vunpack.c.l.b16 %v67
    %v785 = vunpack.c.l.b16 %v68
    %v786 = vunpack.c.l.b16 %v69
    %v787 = vunpack.c.l.b16 %v70
    %v788 = vunpack.c.l.b16 %v71
    %v789 = vunpack.c.l.b16 %v72
    %v790 = vunpack.c.l.b16 %v73
    %v791 = vunpack.c.l.b16 %v74
    %v792 = vunpack.c.l.b16 %v75
    %v793 = vunpack.c.l.b16 %v76
    %v794 = vunpack.c.l.b16 %v77
    %v795 = vunpack.c.l.b16 %v78
    %v796 = vunpack.c.l.b16 %v79
    %v797 = vunpack.c.l.b16 %v80
    %v798 = vunpack.c.l.b16 %v81
    %v799 = vunpack.c.l.b16 %v82
    %v800 = vunpack.c.l.b16 %v83
    %v801 = vunpack.c.l.b16 %v84
    %v802 = vunpack.c.l.b16 %v85
    %v803 = vunpack.c.l.b16 %v86
    %v804 = vunpack.c.l.b16 %v87
    %v805 = vunpack.c.l.b16 %v88
    %v806 = vunpack.c.l.b16 %v89
    %v807 = vunpack.c.l.b16 %v90
    %v808 = vunpack.c.l.b16 %v91
    %v809 = vunpack.c.l.b16 %v92
    %v810 = vunpack.c.l.b16 %v93
    %v811 = vunpack.c.l.b16 %v94
    %v812 = vunpack.c.l.b16 %v95
    %v813 = vunpack.c.l.b16 %v96
    %v814 = vunpack.c.l.b16 %v97
    %v815 = vunpack.c.l.b16 %v98
    %v816 = vunpack.c.l.b16 %v99
    %v817 = vunpack.c.l.b16 %v100
    %v818 = vunpack.c.l.b16 %v101
    %v819 = vunpack.c.l.b16 %v102
    %v820 = vunpack.c.l.b16 %v103
    %v821 = vunpack.c.l.b16 %v104
    %v822 = vunpack.c.l.b16 %v105
    %v823 = vunpack.c.l.b16 %v106
    %v824 = vunpack.c.l.b16 %v107
    %v825 = vunpack.c.l.b16 %v108
    %v826 = vunpack.c.l.b16 %v109
    %v827 = vunpack.c.l.b16 %v110
    %v828 = vunpack.c.l.b16 %v111
    %v829 = vunpack.c.l.b16 %v112
    %v830 = vunpack.c.l.b16 %v113
    %v831 = vunpack.c.l.b16 %v114
    %v832 = vunpack.c.l.b16 %v115
    %v833 = vunpack.c.l.b16 %v116
    %v834 = vunpack.c.l.b16 %v117
    %v835 = vunpack.c.l.b16 %v118
    %v836 = vunpack.c.l.b16 %v119
    %v837 = vunpack.c.l.b16 %v120
    %v838 = vunpack.c.l.b16 %v121
    %v839 = vunpack.c.l.b16 %v122
    %v840 = vunpack.c.l.b16 %v123
    %v841 = vunpack.c.l.b16 %v124
    %v842 = vunpack.c.l.b16 %v125
    %v843 = vunpack.c.l.b16 %v126
    %v844 = vunpack.c.l.b16 %v127
    %v845 = vunpack.c.l.b16 %v128
    %v846 = vunpack.c.l.b16 %v129
    %v847 = vpack.c.b16 %v752, %v751
    %v848 = vpack.c.b16 %v754, %v753
    %v849 = vpack.c.b16 %v756, %v755
    %v850 = vpack.c.b16 %v758, %v757
    %v851 = vpack.c.b16 %v760, %v759
    %v852 = vpack.c.b16 %v762, %v761
    %v853 = vpack.c.b16 %v764, %v763
    %v854 = vpack.c.b16 %v766, %v765
    %v855 = vpack.c.b16 %v768, %v767
    %v856 = vpack.c.b16 %v770, %v769
    %v857 = vpack.c.b16 %v772, %v771
    %v858 = vpack.c.b16 %v774, %v773
    %v859 = vpack.c.b16 %v776, %v775
    %v860 = vpack.c.b16 %v778, %v777
    %v861 = vpack.c.b16 %v780, %v779
    %v862 = vpack.c.b16 %v782, %v781
    %v863 = vpack.c.b16 %v784, %v783
    %v864 = vpack.c.b16 %v786, %v785
    %v865 = vpack.c.b16 %v788, %v787
    %v866 = vpack.c.b16 %v790, %v789
    %v867 = vpack.c.b16 %v792, %v791
    %v868 = vpack.c.b16 %v794, %v793
    %v869 = vpack.c.b16 %v796, %v795
    %v870 = vpack.c.b16 %v798, %v797
    %v871 = vpack.c.b16 %v800, %v799
    %v872 = vpack.c.b16 %v802, %v801
    %v873 = vpack.c.b16 %v804, %v803
    %v874 = vpack.c.b16 %v806, %v805
    %v875 = vpack.c.b16 %v808, %v807
    %v876 = vpack.c.b16 %v810, %v809
    %v877 = vpack.c.b16 %v812, %v811
    %v878 = vpack.c.b16 %v814, %v813
    %v879 = vpack.c.b16 %v816, %v815
    %v880 = vpack.c.b16 %v818, %v817
    %v881 = vpack.c.b16 %v820, %v819
    %v882 = vpack.c.b16 %v822, %v821
    %v883 = vpack.c.b16 %v824, %v823
    %v884 = vpack.c.b16 %v826, %v825
    %v885 = vpack.c.b16 %v828, %v827
    %v886 = vpack.c.b16 %v830, %v829
    %v887 = vpack.c.b16 %v832, %v831
    %v888 = vpack.c.b16 %v834, %v833
    %v889 = vpack.c.b16 %v836, %v835
    %v890 = vpack.c.b16 %v838, %v837
    %v891 = vpack.c.b16 %v840, %v839
    %v892 = vpack.c.b16 %v842, %v841
    %v893 = vpack.c.b16 %v844, %v843
    %v894 = vpack.c.b16 %v846, %v845
    %943 = vmatprep.subr.bf16.mxu0 0
    %944 = vmatpush1.bf16.msra.mxu0 %v847
    %945 = vmatprep.subr.bf16.mxu0 0
    %946 = vmatpush1.bf16.msra.mxu0 %v848
    %947 = vmatprep.subr.bf16.mxu0 0
    %948 = vmatpush1.bf16.msra.mxu0 %v849
    %949 = vmatprep.subr.bf16.mxu0 0
    %950 = vmatpush1.bf16.msra.mxu0 %v850
    %951 = vmatprep.subr.bf16.mxu0 0
    %952 = vmatpush1.bf16.msra.mxu0 %v851
    %953 = vmatprep.subr.bf16.mxu0 0
    %954 = vmatpush1.bf16.msra.mxu0 %v852
    %955 = vmatprep.subr.bf16.mxu0 0
    %956 = vmatpush1.bf16.msra.mxu0 %v853
    %957 = vmatprep.subr.bf16.mxu0 0
    %958 = vmatpush1.bf16.msra.mxu0 %v854
    %959 = vmatprep.subr.bf16.mxu0 0
    %960 = vmatpush1.bf16.msra.mxu0 %v855
    %961 = vmatprep.subr.bf16.mxu0 0
    %962 = vmatpush1.bf16.msra.mxu0 %v856
    %963 = vmatprep.subr.bf16.mxu0 0
    %964 = vmatpush1.bf16.msra.mxu0 %v857
    %965 = vmatprep.subr.bf16.mxu0 0
    %966 = vmatpush1.bf16.msra.mxu0 %v858
    %967 = vmatprep.subr.bf16.mxu0 0
    %968 = vmatpush1.bf16.msra.mxu0 %v859
    %969 = vmatprep.subr.bf16.mxu0 0
    %970 = vmatpush1.bf16.msra.mxu0 %v860
    %971 = vmatprep.subr.bf16.mxu0 0
    %972 = vmatpush1.bf16.msra.mxu0 %v861
    %973 = vmatprep.subr.bf16.mxu0 0
    %974 = vmatpush1.bf16.msra.mxu0 %v862
    %975 = vmatprep.mubr.bf16.mxu0 %v236
    %976 = vmatmul.mubr.bf16.gmra.mrb[0].mxu0 %v235
    %v977 = vpop.f32.mrb[0].mxu0
    %v978 = vadd.f32 %v650, %v977
    %v979 = vpop.f32.mrb[0].mxu0
    %v980 = vpop.f32.mrb[0].mxu0
    %v981 = vpop.f32.mrb[0].mxu0
    %982 = vdwg.mxu0
    %983 = vmatprep.subr.bf16.mxu0 0
    %984 = vmatpush1.bf16.msra.mxu0 %v863
    %985 = vmatprep.subr.bf16.mxu0 0
    %986 = vmatpush1.bf16.msra.mxu0 %v864
    %987 = vmatprep.subr.bf16.mxu0 0
    %988 = vmatpush1.bf16.msra.mxu0 %v865
    %989 = vmatprep.subr.bf16.mxu0 0
    %990 = vmatpush1.bf16.msra.mxu0 %v866
    %991 = vmatprep.subr.bf16.mxu0 0
    %992 = vmatpush1.bf16.msra.mxu0 %v867
    %993 = vmatprep.subr.bf16.mxu0 0
    %994 = vmatpush1.bf16.msra.mxu0 %v868
    %995 = vmatprep.subr.bf16.mxu0 0
    %996 = vmatpush1.bf16.msra.mxu0 %v869
    %997 = vmatprep.subr.bf16.mxu0 0
    %998 = vmatpush1.bf16.msra.mxu0 %v870
    %999 = vmatprep.subr.bf16.mxu0 0
    %1000 = vmatpush1.bf16.msra.mxu0 %v871
    %1001 = vmatprep.subr.bf16.mxu0 0
    %1002 = vmatpush1.bf16.msra.mxu0 %v872
    %1003 = vmatprep.subr.bf16.mxu0 0
    %1004 = vmatpush1.bf16.msra.mxu0 %v873
    %1005 = vmatprep.subr.bf16.mxu0 0
    %1006 = vmatpush1.bf16.msra.mxu0 %v874
    %1007 = vmatprep.subr.bf16.mxu0 0
    %1008 = vmatpush1.bf16.msra.mxu0 %v875
    %1009 = vmatprep.subr.bf16.mxu0 0
    %1010 = vmatpush1.bf16.msra.mxu0 %v876
    %1011 = vmatprep.subr.bf16.mxu0 0
    %1012 = vmatpush1.bf16.msra.mxu0 %v877
    %1013 = vmatprep.subr.bf16.mxu0 0
    %1014 = vmatpush1.bf16.msra.mxu0 %v878
    %1015 = vmatprep.mubr.bf16.mxu0 %v238
    %1016 = vmatmul.mubr.bf16.gmra.mrb[0].mxu0 %v237
    %v1017 = vpop.f32.mrb[0].mxu0
    %v1018 = vadd.f32 %v978, %v1017
    %v1019 = vpop.f32.mrb[0].mxu0
    %v1020 = vpop.f32.mrb[0].mxu0
    %v1021 = vpop.f32.mrb[0].mxu0
    %1022 = vdwg.mxu0
    %1023 = vmatprep.subr.bf16.mxu0 0
    %1024 = vmatpush1.bf16.msra.mxu0 %v879
    %1025 = vmatprep.subr.bf16.mxu0 0
    %1026 = vmatpush1.bf16.msra.mxu0 %v880
    %1027 = vmatprep.subr.bf16.mxu0 0
    %1028 = vmatpush1.bf16.msra.mxu0 %v881
    %1029 = vmatprep.subr.bf16.mxu0 0
    %1030 = vmatpush1.bf16.msra.mxu0 %v882
    %1031 = vmatprep.subr.bf16.mxu0 0
    %1032 = vmatpush1.bf16.msra.mxu0 %v883
    %1033 = vmatprep.subr.bf16.mxu0 0
    %1034 = vmatpush1.bf16.msra.mxu0 %v884
    %1035 = vmatprep.subr.bf16.mxu0 0
    %1036 = vmatpush1.bf16.msra.mxu0 %v885
    %1037 = vmatprep.subr.bf16.mxu0 0
    %1038 = vmatpush1.bf16.msra.mxu0 %v886
    %1039 = vmatprep.subr.bf16.mxu0 0
    %1040 = vmatpush1.bf16.msra.mxu0 %v887
    %1041 = vmatprep.subr.bf16.mxu0 0
    %1042 = vmatpush1.bf16.msra.mxu0 %v888
    %1043 = vmatprep.subr.bf16.mxu0 0
    %1044 = vmatpush1.bf16.msra.mxu0 %v889
    %1045 = vmatprep.subr.bf16.mxu0 0
    %1046 = vmatpush1.bf16.msra.mxu0 %v890
    %1047 = vmatprep.subr.bf16.mxu0 0
    %1048 = vmatpush1.bf16.msra.mxu0 %v891
    %1049 = vmatprep.subr.bf16.mxu0 0
    %1050 = vmatpush1.bf16.msra.mxu0 %v892
    %1051 = vmatprep.subr.bf16.mxu0 0
    %1052 = vmatpush1.bf16.msra.mxu0 %v893
    %1053 = vmatprep.subr.bf16.mxu0 0
    %1054 = vmatpush1.bf16.msra.mxu0 %v894
    %1055 = vmatprep.mubr.bf16.mxu0 %v240
    %1056 = vmatmul.mubr.bf16.gmra.mrb[0].mxu0 %v239
    %v1057 = vpop.f32.mrb[0].mxu0
    %v1058 = vadd.f32 %v1018, %v1057
    %v1059 = vpop.f32.mrb[0].mxu0
    %v1060 = vpop.f32.mrb[0].mxu0
    %v1061 = vpop.f32.mrb[0].mxu0
    %1062 = vdwg.mxu0
    %v1066 = vunpack.c.l.b16 %v31
    %v1067 = vunpack.c.h.b16 %v31
    %v1068 = vunpack.c.l.b16 %v32
    %v1069 = vunpack.c.h.b16 %v32
    %v1070 = vunpack.c.l.b16 %v33
    %v1071 = vunpack.c.h.b16 %v33
    %v1072 = vpack.c.b16 %v1066, %v1066
    %v1073 = vpack.c.b16 %v1067, %v1067
    %v1074 = vpack.c.b16 %v1068, %v1068
    %v1075 = vpack.c.b16 %v1069, %v1069
    %v1076 = vpack.c.b16 %v1070, %v1070
    %v1077 = vpack.c.b16 %v1071, %v1071
    %1084 = vmatprep.subr.bf16.mxu0 0
    %1085 = vmatpush1.bf16.msra.mxu0 %v847
    %1086 = vmatprep.subr.bf16.mxu0 0
    %1087 = vmatpush1.bf16.msra.mxu0 %v848
    %1088 = vmatprep.subr.bf16.mxu0 0
    %1089 = vmatpush1.bf16.msra.mxu0 %v849
    %1090 = vmatprep.subr.bf16.mxu0 0
    %1091 = vmatpush1.bf16.msra.mxu0 %v850
    %1092 = vmatprep.subr.bf16.mxu0 0
    %1093 = vmatpush1.bf16.msra.mxu0 %v851
    %1094 = vmatprep.subr.bf16.mxu0 0
    %1095 = vmatpush1.bf16.msra.mxu0 %v852
    %1096 = vmatprep.subr.bf16.mxu0 0
    %1097 = vmatpush1.bf16.msra.mxu0 %v853
    %1098 = vmatprep.subr.bf16.mxu0 0
    %1099 = vmatpush1.bf16.msra.mxu0 %v854
    %1100 = vmatprep.subr.bf16.mxu0 0
    %1101 = vmatpush1.bf16.msra.mxu0 %v855
    %1102 = vmatprep.subr.bf16.mxu0 0
    %1103 = vmatpush1.bf16.msra.mxu0 %v856
    %1104 = vmatprep.subr.bf16.mxu0 0
    %1105 = vmatpush1.bf16.msra.mxu0 %v857
    %1106 = vmatprep.subr.bf16.mxu0 0
    %1107 = vmatpush1.bf16.msra.mxu0 %v858
    %1108 = vmatprep.subr.bf16.mxu0 0
    %1109 = vmatpush1.bf16.msra.mxu0 %v859
    %1110 = vmatprep.subr.bf16.mxu0 0
    %1111 = vmatpush1.bf16.msra.mxu0 %v860
    %1112 = vmatprep.subr.bf16.mxu0 0
    %1113 = vmatpush1.bf16.msra.mxu0 %v861
    %1114 = vmatprep.subr.bf16.mxu0 0
    %1115 = vmatpush1.bf16.msra.mxu0 %v862
    %1116 = vmatprep.mubr.bf16.mxu0 %v1073
    %1117 = vmatmul.mubr.bf16.gmra.mrb[0].mxu0 %v1072
    %v1118 = vpop.f32.mrb[0].mxu0
    %v1119 = vadd.f32 0.0, %v1118
    %v1120 = vpop.f32.mrb[0].mxu0
    %v1121 = vpop.f32.mrb[0].mxu0
    %v1122 = vpop.f32.mrb[0].mxu0
    %1123 = vdwg.mxu0
    %1124 = vmatprep.subr.bf16.mxu0 0
    %1125 = vmatpush1.bf16.msra.mxu0 %v863
    %1126 = vmatprep.subr.bf16.mxu0 0
    %1127 = vmatpush1.bf16.msra.mxu0 %v864
    %1128 = vmatprep.subr.bf16.mxu0 0
    %1129 = vmatpush1.bf16.msra.mxu0 %v865
    %1130 = vmatprep.subr.bf16.mxu0 0
    %1131 = vmatpush1.bf16.msra.mxu0 %v866
    %1132 = vmatprep.subr.bf16.mxu0 0
    %1133 = vmatpush1.bf16.msra.mxu0 %v867
    %1134 = vmatprep.subr.bf16.mxu0 0
    %1135 = vmatpush1.bf16.msra.mxu0 %v868
    %1136 = vmatprep.subr.bf16.mxu0 0
    %1137 = vmatpush1.bf16.msra.mxu0 %v869
    %1138 = vmatprep.subr.bf16.mxu0 0
    %1139 = vmatpush1.bf16.msra.mxu0 %v870
    %1140 = vmatprep.subr.bf16.mxu0 0
    %1141 = vmatpush1.bf16.msra.mxu0 %v871
    %1142 = vmatprep.subr.bf16.mxu0 0
    %1143 = vmatpush1.bf16.msra.mxu0 %v872
    %1144 = vmatprep.subr.bf16.mxu0 0
    %1145 = vmatpush1.bf16.msra.mxu0 %v873
    %1146 = vmatprep.subr.bf16.mxu0 0
    %1147 = vmatpush1.bf16.msra.mxu0 %v874
    %1148 = vmatprep.subr.bf16.mxu0 0
    %1149 = vmatpush1.bf16.msra.mxu0 %v875
    %1150 = vmatprep.subr.bf16.mxu0 0
    %1151 = vmatpush1.bf16.msra.mxu0 %v876
    %1152 = vmatprep.subr.bf16.mxu0 0
    %1153 = vmatpush1.bf16.msra.mxu0 %v877
    %1154 = vmatprep.subr.bf16.mxu0 0
    %1155 = vmatpush1.bf16.msra.mxu0 %v878
    %1156 = vmatprep.mubr.bf16.mxu0 %v1075
    %1157 = vmatmul.mubr.bf16.gmra.mrb[0].mxu0 %v1074
    %v1158 = vpop.f32.mrb[0].mxu0
    %v1159 = vadd.f32 %v1119, %v1158
    %v1160 = vpop.f32.mrb[0].mxu0
    %v1161 = vpop.f32.mrb[0].mxu0
    %v1162 = vpop.f32.mrb[0].mxu0
    %1163 = vdwg.mxu0
    %1164 = vmatprep.subr.bf16.mxu0 0
    %1165 = vmatpush1.bf16.msra.mxu0 %v879
    %1166 = vmatprep.subr.bf16.mxu0 0
    %1167 = vmatpush1.bf16.msra.mxu0 %v880
    %1168 = vmatprep.subr.bf16.mxu0 0
    %1169 = vmatpush1.bf16.msra.mxu0 %v881
    %1170 = vmatprep.subr.bf16.mxu0 0
    %1171 = vmatpush1.bf16.msra.mxu0 %v882
    %1172 = vmatprep.subr.bf16.mxu0 0
    %1173 = vmatpush1.bf16.msra.mxu0 %v883
    %1174 = vmatprep.subr.bf16.mxu0 0
    %1175 = vmatpush1.bf16.msra.mxu0 %v884
    %1176 = vmatprep.subr.bf16.mxu0 0
    %1177 = vmatpush1.bf16.msra.mxu0 %v885
    %1178 = vmatprep.subr.bf16.mxu0 0
    %1179 = vmatpush1.bf16.msra.mxu0 %v886
    %1180 = vmatprep.subr.bf16.mxu0 0
    %1181 = vmatpush1.bf16.msra.mxu0 %v887
    %1182 = vmatprep.subr.bf16.mxu0 0
    %1183 = vmatpush1.bf16.msra.mxu0 %v888
    %1184 = vmatprep.subr.bf16.mxu0 0
    %1185 = vmatpush1.bf16.msra.mxu0 %v889
    %1186 = vmatprep.subr.bf16.mxu0 0
    %1187 = vmatpush1.bf16.msra.mxu0 %v890
    %1188 = vmatprep.subr.bf16.mxu0 0
    %1189 = vmatpush1.bf16.msra.mxu0 %v891
    %1190 = vmatprep.subr.bf16.mxu0 0
    %1191 = vmatpush1.bf16.msra.mxu0 %v892
    %1192 = vmatprep.subr.bf16.mxu0 0
    %1193 = vmatpush1.bf16.msra.mxu0 %v893
    %1194 = vmatprep.subr.bf16.mxu0 0
    %1195 = vmatpush1.bf16.msra.mxu0 %v894
    %1196 = vmatprep.mubr.bf16.mxu0 %v1077
    %1197 = vmatmul.mubr.bf16.gmra.mrb[0].mxu0 %v1076
    %v1198 = vpop.f32.mrb[0].mxu0
    %v1199 = vadd.f32 %v1159, %v1198
    %v1200 = vpop.f32.mrb[0].mxu0
    %v1201 = vpop.f32.mrb[0].mxu0
    %v1202 = vpop.f32.mrb[0].mxu0
    %1203 = vdwg.mxu0
    %v1204 = vadd.f32 %v1058, %v1199
    %v1205 = vld [vmem:[#allocation2] sm:$0xff]
    %v1206 = vadd.f32 %v1205, %v1204
    %vm1207 = vcmask 130048
    %1208 = vst.msk [vmem:[#allocation2] sm:$0xff] %vm1207, %v1206
    // Predicated region
    $region26: #{bilinear_pallas.1} parent=1 // pred_check
      %p1209 = pneg %p22
    $region27: #{bilinear_pallas.1} parent=1 // pred_check_branch
      %1211 = sbr.rel (%p1209) target = $region29
    $region28: #{bilinear_pallas.1} parent=1 // pred_region
      %v1212 = vld [vmem:[#allocation2] sm:$0xff]
      %v1213 = vld [vmem:[%s4] sm:$0x1]
      %v1215 = vlaneseq
      %v1216 = vshrl.u32 %v1215, 7
      %v1217 = vsub.s32 0, %v1216
      %v1218 = vrot.slane %v1213, %v1217
      %v1220 = vadd.f32 %v1212, %v1218
      %1221 = vst.msk [vmem:[#allocation3] sm:$0xff] %vm1207, %v1220
    $region29: #{bilinear_pallas.1} parent=1 // pred_fallthru
      _
    // Predicated region
    $region30: #{bilinear_pallas.1} parent=1 // pred_check
      _
    $region31: #{bilinear_pallas.1} parent=1 // pred_check_branch
      %1223 = sbr.rel (0) target = $region33
    $region32: #{bilinear_pallas.1} parent=1 // pred_region
      %s1225 = ssub.s32 128, 128
      %1226 = vsyncadd [#allocation4], %s1225
      %s1228 = sshll.u32 [#allocation3], 4
      %s1229 = int_to_ptr.vmem [resolvable:$true] %s1228
      %1231 = dma.vmem_to_hbm [thread:$0]  %s1229, 128, %s5, [#allocation4]
    $region33: #{bilinear_pallas.1} parent=1 // pred_fallthru
      _
    // Predicated region
    $region34: #{bilinear_pallas.1} parent=1 // pred_check
      _
    $region35: #{bilinear_pallas.1} parent=1 // pred_check_branch
      %1233 = sbr.rel (0) target = $region37
    $region36: #{bilinear_pallas.1} parent=1 // pred_region
      %1234 = dma.done [#allocation4], 128
    $region37: #{bilinear_pallas.1} parent=1 // pred_fallthru
      _
    %1235 = vsyncpa [#allocation4], 1

</llo_original>
